<compile_context>
chip_gen: v7x
topology: tpu7x:2x2x1
jax: 0.10.0
libtpu: 0.0.40
codegen_flags: <defaults>
</compile_context>

<pallas_src>
import math

import jax
import jax.numpy as jnp
from jax.experimental import pallas as pl
from jax.experimental.pallas import tpu as pltpu

# Per-block VMEM budget (bytes). 4x (double-buffered in + out) stays < 8 MiB.
_BLOCK_BYTE_BUDGET = 2 * 1024 * 1024
# Below this per-index slab size, skip Pallas and use XLA's native gather.
_MIN_SLAB_BYTES = 64 * 1024


def _select_kernel(idx_ref, x_ref, o_ref):
    # idx_ref lives in SMEM (scalar prefetch); the data-dependent gather is
    # done entirely by the input index_map.  The body just streams the block.
    del idx_ref
    o_ref[...] = x_ref[...]


def _pick_tile(n, bytes_per_unit, budget, align):
    """Largest divisor t of n with (t % align == 0 or t == n) that fits budget."""
    divisors = [d for d in range(1, n + 1) if n % d == 0]
    legal = [d for d in divisors if d % align == 0 or d == n]
    fitting = [d for d in legal if d * bytes_per_unit <= budget]
    if fitting:
        return max(fitting)
    return min(legal)  # smallest legal tile; may exceed budget only for huge rows


def index_select_pallas(x, dim, index):
    """Equivalent of torch.index_select(x, dim, index), gathering in place."""
    index = jnp.asarray(index, dtype=jnp.int32)
    if index.ndim != 1:
        raise ValueError("index must be 1-D")

    ndim = x.ndim
    dim = dim % ndim
    d = x.shape[dim]
    lead = x.shape[:dim]
    trail = x.shape[dim + 1:]
    k = index.shape[0]
    itemsize = jnp.dtype(x.dtype).itemsize
    slab_elems = math.prod(trail) if trail else 1
    slab_bytes = slab_elems * itemsize

    # Keep the data-dependent DMA in bounds (torch would raise on OOB indices;
    # for traced indices we clamp instead of faulting).
    index = jnp.clip(index, 0, max(d - 1, 0))

    # Fallbacks: empty work, no trailing slab (dim is the last axis), or a
    # per-index slab so small that per-grid-step overhead dominates.
    if (k == 0 or d == 0 or math.prod(x.shape) == 0 or len(trail) == 0
            or slab_bytes < _MIN_SLAB_BYTES):
        return jnp.take(x, index, axis=dim)

    n_lead = len(lead)
    n_trail = len(trail)

    # Tile the first trailing dim so one block fits the VMEM budget while the
    # minor (lane) dims stay full.
    if n_trail == 1:
        align = 128                           # tiling the lane dim
    elif n_trail == 2:
        align = 8 * max(1, 4 // itemsize)     # tiling the sublane dim
    else:
        align = 1                             # last two dims stay full
    row_bytes = (slab_elems // trail[0]) * itemsize
    t1 = _pick_tile(trail[0], row_bytes, _BLOCK_BYTE_BUDGET, align)
    n_tiles = trail[0] // t1

    block_shape = (1,) * n_lead + (1, t1) + trail[1:]
    grid = lead + (k, n_tiles)

    def x_index_map(*args):
        *g, idx_ref = args                    # prefetch ref is trailing arg
        lead_idx = g[:n_lead]
        i, j = g[n_lead], g[n_lead + 1]
        return (*lead_idx, idx_ref[i], j) + (0,) * (n_trail - 1)

    def out_index_map(*args):
        *g, _ = args
        lead_idx = g[:n_lead]
        i, j = g[n_lead], g[n_lead + 1]
        return (*lead_idx, i, j) + (0,) * (n_trail - 1)

    out_shape = lead + (k,) + trail
    out_bytes = math.prod(out_shape) * itemsize

    return pl.pallas_call(
        _select_kernel,
        out_shape=jax.ShapeDtypeStruct(out_shape, x.dtype),
        grid_spec=pltpu.PrefetchScalarGridSpec(
            num_scalar_prefetch=1,
            grid=grid,
            in_specs=[pl.BlockSpec(block_shape, x_index_map)],
            out_specs=pl.BlockSpec(block_shape, out_index_map),
        ),
        compiler_params=pltpu.CompilerParams(
            dimension_semantics=("parallel",) * len(grid),
        ),
        cost_estimate=pl.CostEstimate(
            flops=0, transcendentals=0, bytes_accessed=2 * out_bytes),
    )(index, x)


class SelectLayer:
    """JAX/Pallas port of the PyTorch SelectLayer (torch.index_select)."""

    def __init__(self, dim, index):
        self.dim = dim
        self.index = jnp.asarray(index, dtype=jnp.int32)

    def __call__(self, x):
        return index_select_pallas(x, self.dim, self.index)


if __name__ == "__main__":
    key = jax.random.PRNGKey(0)
    k1, k2, k3 = jax.random.split(key, 3)

    # Case 1: middle-dim gather, per-index slab 256 KiB -> Pallas path with
    # leading-dim grid axes and lane-dense (256, 256) blocks.
    x1 = jax.random.normal(k1, (2, 4, 256, 256), dtype=jnp.float32)
    idx1 = [3, 0, 2]
    out1 = jax.block_until_ready(SelectLayer(1, idx1)(x1))
    ref1 = jnp.take(x1, jnp.asarray(idx1, jnp.int32), axis=1)
    assert out1.shape == ref1.shape and out1.dtype == ref1.dtype
    assert bool(jnp.all(out1 == ref1))

    # Case 2: leading-dim gather (no leading grid axes), 128 KiB slabs.
    x2 = jax.random.normal(k2, (8, 256, 128), dtype=jnp.float32)
    idx2 = [5, 1, 7, 2, 2]
    out2 = jax.block_until_ready(SelectLayer(0, idx2)(x2))
    ref2 = jnp.take(x2, jnp.asarray(idx2, jnp.int32), axis=0)
    assert out2.shape == ref2.shape and bool(jnp.all(out2 == ref2))

    # Case 3: tiny per-index slab (original demo shape) -> jnp.take fallback.
    x3 = jax.random.normal(k3, (2, 4, 16, 16), dtype=jnp.float32)
    idx3 = [3, 0, 2]
    out3 = jax.block_until_ready(SelectLayer(1, idx3)(x3))
    ref3 = jnp.take(x3, jnp.asarray(idx3, jnp.int32), axis=1)
    assert out3.shape == ref3.shape and bool(jnp.all(out3 == ref3))

    print("KERNEL_OK")
</pallas_src>

<mosaic_0001>
module attributes {stable_mosaic.version = 11 : i64} {
  func.func @_select_kernel(%arg0: i32, %arg1: i32, %arg2: i32, %arg3: memref<3xi32, #tpu.memory_space<smem>>, %arg4: memref<1x1x256x256xf32, #tpu.memory_space<vmem>>, %arg5: memref<1x1x256x256xf32, #tpu.memory_space<vmem>>) attributes {dimension_semantics = [#tpu.dimension_semantics<parallel>, #tpu.dimension_semantics<parallel>, #tpu.dimension_semantics<parallel>], iteration_bounds = array<i64: 2, 3, 1>, scalar_prefetch = 1 : i64, scratch_operands = 0 : i64, tpu.core_type = #tpu.core_type<tc>, window_params = [{transform_indices = @transform_0, window_bounds = array<i64: 1, 1, 256, 256>}, {transform_indices = @transform_1, window_bounds = array<i64: 1, 1, 256, 256>}]} {
    %c0 = arith.constant 0 : index
    %c0_0 = arith.constant 0 : index
    %c0_1 = arith.constant 0 : index
    %c0_2 = arith.constant 0 : index
    %0 = vector.load %arg4[%c0, %c0_0, %c0_1, %c0_2] : memref<1x1x256x256xf32, #tpu.memory_space<vmem>>, vector<1x1x256x256xf32>
    %c0_3 = arith.constant 0 : index
    %c0_4 = arith.constant 0 : index
    %c0_5 = arith.constant 0 : index
    %c0_6 = arith.constant 0 : index
    %1 = vector.load %arg5[%c0_3, %c0_4, %c0_5, %c0_6] : memref<1x1x256x256xf32, #tpu.memory_space<vmem>>, vector<1x1x256x256xf32>
    tpu.vector_store %arg5[%c0_3, %c0_4, %c0_5, %c0_6], %0 {strides = array<i32>} : memref<1x1x256x256xf32, #tpu.memory_space<vmem>>, vector<1x1x256x256xf32>,
    return
  }
  func.func @transform_0(%arg0: i32, %arg1: i32, %arg2: i32, %arg3: memref<3xi32, #tpu.memory_space<smem>>) -> (i32, i32, i32, i32) {
    %0 = arith.index_cast %arg1 : i32 to index
    %1 = memref.load %arg3[%0] : memref<3xi32, #tpu.memory_space<smem>>
    %c0_i32 = arith.constant 0 : i32
    %c0_i32_0 = arith.constant 0 : i32
    return %arg0, %1, %arg2, %c0_i32 : i32, i32, i32, i32
  }
  func.func @transform_1(%arg0: i32, %arg1: i32, %arg2: i32, %arg3: memref<3xi32, #tpu.memory_space<smem>>) -> (i32, i32, i32, i32) {
    %c0_i32 = arith.constant 0 : i32
    %c0_i32_0 = arith.constant 0 : i32
    return %arg0, %arg1, %arg2, %c0_i32 : i32, i32, i32, i32
  }
}

</mosaic_0001>

<llo_original>
// kernel: tpu_custom_call.1
$region0: #{tpu_custom_call.1}
  #allocation0 [shape = 'u32[]', space=smem, size = 0x4, offset = 0x4, fixed_abs, tag = 'smem constant byte address 0x4 - core index']
  #allocation1 [shape = 'u32[144,128]{1,0:T(1,128)}', space=vmem, size = 0x12000, scoped, tag = 'internal scratch']
  #allocation2 [shape = 's32[1]{0}', space=sflag, size = 0x4, scoped, tag = 'scoped memory for tpu_custom_call.1']
  #allocation3 [shape = 'u8[512]{0}', space=smem, size = 0x200, scoped, tag = 'prefetched SMEM operand 0']
  %s0 = inlined_call_operand.hbm [shape: s32[3], index: 0, kind: input, shape index: {}]
  %s1 = inlined_call_operand.hbm [shape: f32[2,4,256,256], index: 1, kind: input, shape index: {}]
  %s2 = inlined_call_operand.hbm [shape: f32[2,3,256,256], index: 2, kind: output, shape index: {}]
  %s3 = sld [smem:[#allocation0]]
  $region41: #{tpu_custom_call.1} parent=0
    _
  %s5 = ssub.s32 1, %s3
  %s6 = scalar_select 0, %s5, %s3
  %8 = dma.hbm_to_smem %s0, 16, [#allocation3], [#allocation2]
  %9 = dma.done [#allocation2], 16
  %10 = sfence
  $region1: #{tpu_custom_call.1} parent=0
    #allocation4 [shape = 'u8[524288]{0}', space=vmem, size = 0x80000, scoped, tag = 'input window, operand 1']
    #allocation5 [shape = 's32[2]{0}', space=sflag, size = 0x8, scoped, tag = 'scoped memory for tpu_custom_call.1']
    #allocation6 [shape = 's32[2]{0}', space=sflag, size = 0x8, scoped, tag = 'scoped memory for tpu_custom_call.1']
    #allocation7 [shape = 'u8[524288]{0}', space=vmem, size = 0x80000, scoped, tag = 'output window, operand 0']
    %11 = vsyncpa [#allocation5], 0
    %s12 = scalar_lea.sflag [#allocation5], 1
    %13 = vsyncpa %s12, 0
    %14 = vsyncpa [#allocation6], 0
    %s15 = scalar_lea.sflag [#allocation6], 1
    %16 = vsyncpa %s15, 0
    loop: start=0, step=1, limit=8
    $region2: #{tpu_custom_call.1} parent=1 // loop_pre_header
      _
    $region3: #{tpu_custom_call.1} parent=1 // loop_header
      %s18 = sphi 0, %s22
      %p19 = scmp.ge.s32.totalorder %s18, 8
      %s25 = sphi 0, %s44
      %s26 = sphi 0, %s40
      %s27 = sphi 0, %s36
      %s28 = sphi 0, %s25
      %s29 = sphi 0, %s26
      %s30 = sphi 0, %s27
      %s31 = sphi 0, %s28
      %s32 = sphi 0, %s29
      %s33 = sphi 0, %s30
      %s53 = sphi 0, %s55
      %s56 = sphi 0, %s53
      %s57 = sphi 0, %s56
      %s73 = sphi 0, %s57
      %s83 = sphi 0, %s85
      %s86 = sphi 0, %s83
      %s87 = sphi 0, %s86
      %s103 = sphi 0, %s87
    $region4: #{tpu_custom_call.1} parent=1 // loop_header_branch
      %21 = sbr.rel (%p19) target = $region8
    $region5: #{tpu_custom_call.1} parent=1 // loop_body
      %s23 = ssub.s32 %s18, 1
      %s24 = ssub.s32 %s18, 2
      %s34 = sadd.s32 1, %s27
      %p35 = scmp.ge.s32.totalorder %s34, 1
      %s36 = scalar_select %p35, 0, %s34
      %s37 = sadd.s32 1, %s26
      %s38 = scalar_select %p35, %s37, %s26
      %p39 = scmp.ge.s32.totalorder %s38, 3
      %s40 = scalar_select %p39, 0, %s38
      %s41 = sadd.s32 1, %s25
      %s42 = scalar_select %p39, %s41, %s25
      %p43 = scmp.ge.s32.totalorder %s42, 2
      %s44 = scalar_select %p43, 0, %s42
      %s45 = sld [smem:[#allocation3 + %s26]]
      %s46 = sld [smem:[#allocation3 + %s40]]
      %s47 = ssub.s32 %s25, %s44
      %s48 = ssub.s32 %s45, %s46
      %s49 = sor.u32 %s47, %s48
      %s50 = ssub.s32 %s27, %s36
      %s51 = sor.u32 %s49, %s50
      %p52 = scmp.eq.s32.totalorder %s51, 0
      %s54 = sadd.s32 %s53, 1
      %s55 = scalar_select %p52, %s53, %s54
      %p58 = pneg %p52
      %p59 = scmp.eq.s32.totalorder %s18, 5
      %p60 = por %p58, %p59
      %p61 = scmp.ne.s32.totalorder %s53, %s56
      %p62 = scmp.eq.s32.totalorder %s18, 0
      %p63 = por %p61, %p62
      %p64 = scmp.ne.s32.totalorder %s53, %s56
      %p65 = scmp.eq.s32.totalorder %s23, 5
      %p66 = por %p64, %p65
      %p67 = scmp.ne.s32.totalorder %s56, %s57
      %p68 = scmp.eq.s32.totalorder %s23, 0
      %p69 = por %p67, %p68
      %p70 = scmp.ne.s32.totalorder %s56, %s57
      %p71 = scmp.eq.s32.totalorder %s24, 5
      %p72 = por %p70, %p71
      %p74 = scmp.ne.s32.totalorder %s57, %s73
      %p75 = scmp.eq.s32.totalorder %s24, 0
      %p76 = por %p74, %p75
      %s77 = ssub.s32 %s25, %s44
      %s78 = ssub.s32 %s26, %s40
      %s79 = sor.u32 %s77, %s78
      %s80 = ssub.s32 %s27, %s36
      %s81 = sor.u32 %s79, %s80
      %p82 = scmp.eq.s32.totalorder %s81, 0
      %s84 = sadd.s32 %s83, 1
      %s85 = scalar_select %p82, %s83, %s84
      %p88 = pneg %p82
      %p89 = scmp.eq.s32.totalorder %s18, 5
      %p90 = por %p88, %p89
      %p91 = scmp.ne.s32.totalorder %s83, %s86
      %p92 = scmp.eq.s32.totalorder %s18, 0
      %p93 = por %p91, %p92
      %p94 = scmp.ne.s32.totalorder %s83, %s86
      %p95 = scmp.eq.s32.totalorder %s23, 5
      %p96 = por %p94, %p95
      %p97 = scmp.ne.s32.totalorder %s86, %s87
      %p98 = scmp.eq.s32.totalorder %s23, 0
      %p99 = por %p97, %p98
      %p100 = scmp.ne.s32.totalorder %s86, %s87
      %p101 = scmp.eq.s32.totalorder %s24, 5
      %p102 = por %p100, %p101
      %p104 = scmp.ne.s32.totalorder %s87, %s103
      %p105 = scmp.eq.s32.totalorder %s24, 0
      %p106 = por %p104, %p105
      %p107 = scmp.le.s32.totalorder 1, %s18
      %p108 = scmp.lt.s32.totalorder %s18, 7
      %p109 = pnand %p107, %p108
      %p110 = pneg %p109
      // Predicated region
      $region9: #{tpu_custom_call.1} parent=5 // pred_check
        _
      $region10: #{tpu_custom_call.1} parent=5 // pred_check_branch
        %112 = sbr.rel (%p109) target = $region12
      $region11: #{tpu_custom_call.1} parent=5 // pred_region
        %s113 = ssub.s32 %s18, 1
      $region12: #{tpu_custom_call.1} parent=5 // pred_fallthru
        _
      %p114 = scmp.lt.s32.totalorder %s18, 6
      // Predicated region
      $region13: #{tpu_custom_call.1} parent=5 // pred_check
        %p115 = pneg %p114
      $region14: #{tpu_custom_call.1} parent=5 // pred_check_branch
        %117 = sbr.rel (%p115) target = $region16
      $region15: #{tpu_custom_call.1} parent=5 // pred_region
        // Predicated region
        $region17: #{tpu_custom_call.1} parent=15 // pred_check
          %p118 = pneg %p63
        $region18: #{tpu_custom_call.1} parent=15 // pred_check_branch
          %120 = sbr.rel (%p118) target = $region20
        $region19: #{tpu_custom_call.1} parent=15 // pred_region
          %s121 = sand.u32 %s53, 1
          %s122 = scalar_lea.sflag [#allocation5], %s121
          %s123 = sand.u32 %s53, 1
          %s124 = smul.addr %s123, 512
          %s125 = scalar_lea.vmem [#allocation4], %s124
          %s126 = sld [smem:[#allocation3 + %s26]]
          %s127 = smul.u32 32, %s27
          %s129 = ssub.s32 8192, 8192
          %130 = vsyncadd %s122, %s129
          %s131 = smul.addr %s127, 2
          %s132 = smul.addr %s126, 64
          %s133 = sadd.s32 %s131, %s132
          %s134 = smul.addr %s25, 256
          %s135 = sadd.s32 %s133, %s134
          %s136 = smul.addr %s135, 128
          %s137 = scalar_lea.hbm %s1, %s136
          %s138 = sshll.u32 %s125, 4
          %s139 = int_to_ptr.vmem [resolvable:$true] %s138
          %144 = dma.hbm_to_vmem [thread:$0]  %s137, 8192, %s139, %s122, 256, 256, 16
        $region20: #{tpu_custom_call.1} parent=15 // pred_fallthru
          _
      $region16: #{tpu_custom_call.1} parent=5 // pred_fallthru
        _
      %p145 = scmp.le.s32.totalorder 1, %s18
      %p146 = scmp.lt.s32.totalorder %s18, 7
      %p147 = pnand %p145, %p146
      %p148 = pneg %p147
      // Predicated region
      $region21: #{tpu_custom_call.1} parent=5 // pred_check
        _
      $region22: #{tpu_custom_call.1} parent=5 // pred_check_branch
        %150 = sbr.rel (%p147) target = $region24
      $region23: #{tpu_custom_call.1} parent=5 // pred_region
        %s151 = ssub.s32 %s18, 1
        %s152 = sand.u32 %s56, 1
        %s153 = scalar_lea.sflag [#allocation5], %s152
        %s154 = sand.u32 %s56, 1
        %s155 = smul.addr %s154, 512
        %s156 = scalar_lea.vmem [#allocation4], %s155
        // Predicated region
        $region25: #{tpu_custom_call.1} parent=23 // pred_check
          %p157 = pneg %p69
        $region26: #{tpu_custom_call.1} parent=23 // pred_check_branch
          %159 = sbr.rel (%p157) target = $region28
        $region27: #{tpu_custom_call.1} parent=23 // pred_region
          %160 = dma.done %s153, 8192
        $region28: #{tpu_custom_call.1} parent=23 // pred_fallthru
          _
        %s161 = sand.u32 %s56, 1
        %s162 = scalar_lea.sflag [#allocation5], %s161
        %s163 = sand.u32 %s56, 1
        %s164 = smul.addr %s163, 512
        %s165 = scalar_lea.vmem [#allocation4], %s164
        %p166 = pneg %p69
        %p167 = pneg %p66
        %p168 = pneg %p99
        %p169 = pneg %p96
        %s170 = sand.u32 %s86, 1
        %s171 = scalar_lea.sflag [#allocation6], %s170
        %s172 = sand.u32 %s86, 1
        %s173 = smul.addr %s172, 512
        %s174 = scalar_lea.vmem [#allocation7], %s173
        %s175 = sld [smem:[#allocation3 + %s29]]
        %s176 = smul.u32 32, %s30
        %s177 = smul.u32 32, %s30
        %v178 = vld [vmem:[%s156] sm:$0xff]
        %v179 = vld [vmem:[%s156 + $0x8] sm:$0xff]
        %v180 = vld [vmem:[%s156 + $0x10] sm:$0xff]
        %v181 = vld [vmem:[%s156 + $0x18] sm:$0xff]
        %v182 = vld [vmem:[%s156 + $0x20] sm:$0xff]
        %v183 = vld [vmem:[%s156 + $0x28] sm:$0xff]
        %v184 = vld [vmem:[%s156 + $0x30] sm:$0xff]
        %v185 = vld [vmem:[%s156 + $0x38] sm:$0xff]
        %v186 = vld [vmem:[%s156 + $0x40] sm:$0xff]
        %v187 = vld [vmem:[%s156 + $0x48] sm:$0xff]
        %v188 = vld [vmem:[%s156 + $0x50] sm:$0xff]
        %v189 = vld [vmem:[%s156 + $0x58] sm:$0xff]
        %v190 = vld [vmem:[%s156 + $0x60] sm:$0xff]
        %v191 = vld [vmem:[%s156 + $0x68] sm:$0xff]
        %v192 = vld [vmem:[%s156 + $0x70] sm:$0xff]
        %v193 = vld [vmem:[%s156 + $0x78] sm:$0xff]
        %v194 = vld [vmem:[%s156 + $0x80] sm:$0xff]
        %v195 = vld [vmem:[%s156 + $0x88] sm:$0xff]
        %v196 = vld [vmem:[%s156 + $0x90] sm:$0xff]
        %v197 = vld [vmem:[%s156 + $0x98] sm:$0xff]
        %v198 = vld [vmem:[%s156 + $0xa0] sm:$0xff]
        %v199 = vld [vmem:[%s156 + $0xa8] sm:$0xff]
        %v200 = vld [vmem:[%s156 + $0xb0] sm:$0xff]
        %v201 = vld [vmem:[%s156 + $0xb8] sm:$0xff]
        %v202 = vld [vmem:[%s156 + $0xc0] sm:$0xff]
        %v203 = vld [vmem:[%s156 + $0xc8] sm:$0xff]
        %v204 = vld [vmem:[%s156 + $0xd0] sm:$0xff]
        %v205 = vld [vmem:[%s156 + $0xd8] sm:$0xff]
        %v206 = vld [vmem:[%s156 + $0xe0] sm:$0xff]
        %v207 = vld [vmem:[%s156 + $0xe8] sm:$0xff]
        %v208 = vld [vmem:[%s156 + $0xf0] sm:$0xff]
        %v209 = vld [vmem:[%s156 + $0xf8] sm:$0xff]
        %v210 = vld [vmem:[%s156 + $0x100] sm:$0xff]
        %v211 = vld [vmem:[%s156 + $0x108] sm:$0xff]
        %v212 = vld [vmem:[%s156 + $0x110] sm:$0xff]
        %v213 = vld [vmem:[%s156 + $0x118] sm:$0xff]
        %v214 = vld [vmem:[%s156 + $0x120] sm:$0xff]
        %v215 = vld [vmem:[%s156 + $0x128] sm:$0xff]
        %v216 = vld [vmem:[%s156 + $0x130] sm:$0xff]
        %v217 = vld [vmem:[%s156 + $0x138] sm:$0xff]
        %v218 = vld [vmem:[%s156 + $0x140] sm:$0xff]
        %v219 = vld [vmem:[%s156 + $0x148] sm:$0xff]
        %v220 = vld [vmem:[%s156 + $0x150] sm:$0xff]
        %v221 = vld [vmem:[%s156 + $0x158] sm:$0xff]
        %v222 = vld [vmem:[%s156 + $0x160] sm:$0xff]
        %v223 = vld [vmem:[%s156 + $0x168] sm:$0xff]
        %v224 = vld [vmem:[%s156 + $0x170] sm:$0xff]
        %v225 = vld [vmem:[%s156 + $0x178] sm:$0xff]
        %v226 = vld [vmem:[%s156 + $0x180] sm:$0xff]
        %v227 = vld [vmem:[%s156 + $0x188] sm:$0xff]
        %v228 = vld [vmem:[%s156 + $0x190] sm:$0xff]
        %v229 = vld [vmem:[%s156 + $0x198] sm:$0xff]
        %v230 = vld [vmem:[%s156 + $0x1a0] sm:$0xff]
        %v231 = vld [vmem:[%s156 + $0x1a8] sm:$0xff]
        %v232 = vld [vmem:[%s156 + $0x1b0] sm:$0xff]
        %v233 = vld [vmem:[%s156 + $0x1b8] sm:$0xff]
        %v234 = vld [vmem:[%s156 + $0x1c0] sm:$0xff]
        %v235 = vld [vmem:[%s156 + $0x1c8] sm:$0xff]
        %v236 = vld [vmem:[%s156 + $0x1d0] sm:$0xff]
        %v237 = vld [vmem:[%s156 + $0x1d8] sm:$0xff]
        %v238 = vld [vmem:[%s156 + $0x1e0] sm:$0xff]
        %v239 = vld [vmem:[%s156 + $0x1e8] sm:$0xff]
        %v240 = vld [vmem:[%s156 + $0x1f0] sm:$0xff]
        %v241 = vld [vmem:[%s156 + $0x1f8] sm:$0xff]
        %242 = vst [vmem:[%s174] sm:$0xff] %v178
        %243 = vst [vmem:[%s174 + $0x8] sm:$0xff] %v179
        %244 = vst [vmem:[%s174 + $0x10] sm:$0xff] %v180
        %245 = vst [vmem:[%s174 + $0x18] sm:$0xff] %v181
        %246 = vst [vmem:[%s174 + $0x20] sm:$0xff] %v182
        %247 = vst [vmem:[%s174 + $0x28] sm:$0xff] %v183
        %248 = vst [vmem:[%s174 + $0x30] sm:$0xff] %v184
        %249 = vst [vmem:[%s174 + $0x38] sm:$0xff] %v185
        %250 = vst [vmem:[%s174 + $0x40] sm:$0xff] %v186
        %251 = vst [vmem:[%s174 + $0x48] sm:$0xff] %v187
        %252 = vst [vmem:[%s174 + $0x50] sm:$0xff] %v188
        %253 = vst [vmem:[%s174 + $0x58] sm:$0xff] %v189
        %254 = vst [vmem:[%s174 + $0x60] sm:$0xff] %v190
        %255 = vst [vmem:[%s174 + $0x68] sm:$0xff] %v191
        %256 = vst [vmem:[%s174 + $0x70] sm:$0xff] %v192
        %257 = vst [vmem:[%s174 + $0x78] sm:$0xff] %v193
        %258 = vst [vmem:[%s174 + $0x80] sm:$0xff] %v194
        %259 = vst [vmem:[%s174 + $0x88] sm:$0xff] %v195
        %260 = vst [vmem:[%s174 + $0x90] sm:$0xff] %v196
        %261 = vst [vmem:[%s174 + $0x98] sm:$0xff] %v197
        %262 = vst [vmem:[%s174 + $0xa0] sm:$0xff] %v198
        %263 = vst [vmem:[%s174 + $0xa8] sm:$0xff] %v199
        %264 = vst [vmem:[%s174 + $0xb0] sm:$0xff] %v200
        %265 = vst [vmem:[%s174 + $0xb8] sm:$0xff] %v201
        %266 = vst [vmem:[%s174 + $0xc0] sm:$0xff] %v202
        %267 = vst [vmem:[%s174 + $0xc8] sm:$0xff] %v203
        %268 = vst [vmem:[%s174 + $0xd0] sm:$0xff] %v204
        %269 = vst [vmem:[%s174 + $0xd8] sm:$0xff] %v205
        %270 = vst [vmem:[%s174 + $0xe0] sm:$0xff] %v206
        %271 = vst [vmem:[%s174 + $0xe8] sm:$0xff] %v207
        %272 = vst [vmem:[%s174 + $0xf0] sm:$0xff] %v208
        %273 = vst [vmem:[%s174 + $0xf8] sm:$0xff] %v209
        %274 = vst [vmem:[%s174 + $0x100] sm:$0xff] %v210
        %275 = vst [vmem:[%s174 + $0x108] sm:$0xff] %v211
        %276 = vst [vmem:[%s174 + $0x110] sm:$0xff] %v212
        %277 = vst [vmem:[%s174 + $0x118] sm:$0xff] %v213
        %278 = vst [vmem:[%s174 + $0x120] sm:$0xff] %v214
        %279 = vst [vmem:[%s174 + $0x128] sm:$0xff] %v215
        %280 = vst [vmem:[%s174 + $0x130] sm:$0xff] %v216
        %281 = vst [vmem:[%s174 + $0x138] sm:$0xff] %v217
        %282 = vst [vmem:[%s174 + $0x140] sm:$0xff] %v218
        %283 = vst [vmem:[%s174 + $0x148] sm:$0xff] %v219
        %284 = vst [vmem:[%s174 + $0x150] sm:$0xff] %v220
        %285 = vst [vmem:[%s174 + $0x158] sm:$0xff] %v221
        %286 = vst [vmem:[%s174 + $0x160] sm:$0xff] %v222
        %287 = vst [vmem:[%s174 + $0x168] sm:$0xff] %v223
        %288 = vst [vmem:[%s174 + $0x170] sm:$0xff] %v224
        %289 = vst [vmem:[%s174 + $0x178] sm:$0xff] %v225
        %290 = vst [vmem:[%s174 + $0x180] sm:$0xff] %v226
        %291 = vst [vmem:[%s174 + $0x188] sm:$0xff] %v227
        %292 = vst [vmem:[%s174 + $0x190] sm:$0xff] %v228
        %293 = vst [vmem:[%s174 + $0x198] sm:$0xff] %v229
        %294 = vst [vmem:[%s174 + $0x1a0] sm:$0xff] %v230
        %295 = vst [vmem:[%s174 + $0x1a8] sm:$0xff] %v231
        %296 = vst [vmem:[%s174 + $0x1b0] sm:$0xff] %v232
        %297 = vst [vmem:[%s174 + $0x1b8] sm:$0xff] %v233
        %298 = vst [vmem:[%s174 + $0x1c0] sm:$0xff] %v234
        %299 = vst [vmem:[%s174 + $0x1c8] sm:$0xff] %v235
        %300 = vst [vmem:[%s174 + $0x1d0] sm:$0xff] %v236
        %301 = vst [vmem:[%s174 + $0x1d8] sm:$0xff] %v237
        %302 = vst [vmem:[%s174 + $0x1e0] sm:$0xff] %v238
        %303 = vst [vmem:[%s174 + $0x1e8] sm:$0xff] %v239
        %304 = vst [vmem:[%s174 + $0x1f0] sm:$0xff] %v240
        %305 = vst [vmem:[%s174 + $0x1f8] sm:$0xff] %v241
        %s306 = sand.u32 %s86, 1
        %s307 = scalar_lea.sflag [#allocation6], %s306
        %s308 = sand.u32 %s86, 1
        %s309 = smul.addr %s308, 512
        %s310 = scalar_lea.vmem [#allocation7], %s309
        // Predicated region
        $region29: #{tpu_custom_call.1} parent=23 // pred_check
          %p311 = pneg %p96
        $region30: #{tpu_custom_call.1} parent=23 // pred_check_branch
          %313 = sbr.rel (%p311) target = $region32
        $region31: #{tpu_custom_call.1} parent=23 // pred_region
          %s314 = smul.u32 32, %s30
          %s316 = ssub.s32 8192, 8192
          %317 = vsyncadd %s307, %s316
          %s318 = smul.addr %s314, 2
          %s319 = smul.addr %s29, 64
          %s320 = sadd.s32 %s318, %s319
          %s321 = smul.addr %s28, 192
          %s322 = sadd.s32 %s320, %s321
          %s323 = smul.addr %s322, 128
          %s324 = scalar_lea.hbm %s2, %s323
          %s325 = sshll.u32 %s310, 4
          %s326 = int_to_ptr.vmem [resolvable:$true] %s325
          %331 = dma.vmem_to_hbm [thread:$0]  %s326, 8192, %s324, %s307, 256, 256, 16
        $region32: #{tpu_custom_call.1} parent=23 // pred_fallthru
          _
      $region24: #{tpu_custom_call.1} parent=5 // pred_fallthru
        _
      %p332 = scmp.le.s32.totalorder 2, %s18
      // Predicated region
      $region33: #{tpu_custom_call.1} parent=5 // pred_check
        %p333 = pneg %p332
      $region34: #{tpu_custom_call.1} parent=5 // pred_check_branch
        %335 = sbr.rel (%p333) target = $region36
      $region35: #{tpu_custom_call.1} parent=5 // pred_region
        %s336 = ssub.s32 %s18, 2
        // Predicated region
        $region37: #{tpu_custom_call.1} parent=35 // pred_check
          %p337 = pneg %p102
        $region38: #{tpu_custom_call.1} parent=35 // pred_check_branch
          %339 = sbr.rel (%p337) target = $region40
        $region39: #{tpu_custom_call.1} parent=35 // pred_region
          %s340 = sand.u32 %s87, 1
          %s341 = scalar_lea.sflag [#allocation6], %s340
          %s342 = sand.u32 %s87, 1
          %s343 = smul.addr %s342, 512
          %s344 = scalar_lea.vmem [#allocation7], %s343
          %345 = dma.done %s341, 8192
        $region40: #{tpu_custom_call.1} parent=35 // pred_fallthru
          _
      $region36: #{tpu_custom_call.1} parent=5 // pred_fallthru
        _
    $region6: #{tpu_custom_call.1} parent=1 // loop_footer
      %s22 = sadd.s32 1, %s18
    $region7: #{tpu_custom_call.1} parent=1 // loop_footer_branch
      %17 = sbr.rel target = $region3
    $region8: #{tpu_custom_call.1} parent=1 // loop_exit
      _
    %346 = vsyncpa [#allocation5], 1
    %s347 = scalar_lea.sflag [#allocation5], 1
    %348 = vsyncpa %s347, 1
    %349 = vsyncpa [#allocation6], 1
    %s350 = scalar_lea.sflag [#allocation6], 1
    %351 = vsyncpa %s350, 1

</llo_original>
